<compile_context>
chip_gen: v7x
topology: tpu7x:2x2x1
jax: 0.10.0
libtpu: 0.0.40
codegen_flags: <defaults>
</compile_context>

<pallas_src>
import jax
import jax.numpy as jnp
from jax.experimental import pallas as pl
from jax.experimental.pallas import tpu as pltpu

_LANE = 128
_SUBLANE = 8


def _make_kernel(n_feats: int, inv_denom: float):
    """Kernel: per-step partial sum of x*wsum, SMEM accumulator, SMEM scalar out."""

    def kernel(*refs):
        # refs = (mean_bias_smem, x_0..x_{n-1}, w_0..w_{n-1}, o_smem, acc_smem)
        mb_ref = refs[0]
        feat_refs = refs[1:1 + n_feats]
        w_refs = refs[1 + n_feats:1 + 2 * n_feats]
        o_ref = refs[1 + 2 * n_feats]
        acc_ref = refs[2 + 2 * n_feats]

        g = pl.program_id(0)

        @pl.when(g == 0)
        def _init():
            acc_ref[0] = jnp.float32(0.0)

        partial = jnp.float32(0.0)
        for x_ref, w_ref in zip(feat_refs, w_refs):
            x = x_ref[...].astype(jnp.float32)
            w = w_ref[...]                       # (1, width) broadcasts over rows
            partial = partial + jnp.sum(x * w)   # VPU multiply + reduce, no MXU
        acc_ref[0] = acc_ref[0] + partial

        @pl.when(g == pl.num_programs(0) - 1)
        def _finalize():
            o_ref[0] = acc_ref[0] * jnp.float32(inv_denom) + mb_ref[0]

    return kernel


def _plan(batch: int, dims):
    """Pick layout + row tile.  Returns (dense, rows_per_step, grid)."""
    dense = all((_LANE % d == 0) and ((batch * d) % _LANE == 0) for d in dims)
    tb = batch
    if dense:
        # Halve the per-step row count while every feature block stays a whole
        # number of (8,128) tiles and blocks stay large (>=512 lane-rows).
        target = 1 << 16
        while (tb % 2 == 0 and tb // 2 >= target
               and all(((tb // 2) * d) % (_SUBLANE * _LANE) == 0 for d in dims)):
            tb //= 2
    else:
        # Row-blocked fallback: tile must divide B and be a multiple of 8
        # (or equal B -> single full block).
        if batch > 2048:
            for cand in range(2048, _SUBLANE - 1, -_SUBLANE):
                if batch % cand == 0:
                    tb = cand
                    break
    return dense, tb, batch // tb


def fake_model_forward(feats, weight, bias):
    """feats: list of (B, d_i) arrays with sum(d_i) == weight.shape[1].

    Returns {"total_loss": scalar f32}, mirroring FakeModel.forward.
    (The unsqueeze(0) adds a size-1 dim that does not change the mean.)
    """
    n = len(feats)
    batch = int(feats[0].shape[0])
    dims = [int(f.shape[1]) for f in feats]
    out_f, in_f = weight.shape
    assert sum(dims) == in_f

    # Tiny precomputes (in_f + 1 floats), done once in the wrapper.
    wsum = jnp.sum(weight.astype(jnp.float32), axis=0)           # (in_f,)
    mean_bias = jnp.mean(bias.astype(jnp.float32)).reshape(1)    # (1,) -> SMEM
    inv_denom = 1.0 / float(batch * out_f)

    dense, tb, grid = _plan(batch, dims)

    offs = [0]
    for d in dims:
        offs.append(offs[-1] + d)

    xs, ws, x_specs, w_specs = [], [], [], []
    for i, f in enumerate(feats):
        d = dims[i]
        w_slice = wsum[offs[i]:offs[i + 1]]
        if dense:
            rows = (batch * d) // _LANE
            blk_rows = (tb * d) // _LANE
            xs.append(f.reshape(rows, _LANE))        # free contiguous reshape
            ws.append(jnp.tile(w_slice, _LANE // d).reshape(1, _LANE))
            x_specs.append(pl.BlockSpec((blk_rows, _LANE), lambda g: (g, 0)))
            w_specs.append(pl.BlockSpec((1, _LANE), lambda g: (0, 0)))
        else:
            xs.append(f)
            ws.append(w_slice.reshape(1, d))
            x_specs.append(pl.BlockSpec((tb, d), lambda g: (g, 0)))
            w_specs.append(pl.BlockSpec((1, d), lambda g: (0, 0)))

    out = pl.pallas_call(
        _make_kernel(n, inv_denom),
        grid=(grid,),
        out_shape=jax.ShapeDtypeStruct((1,), jnp.float32),
        in_specs=[pl.BlockSpec(memory_space=pltpu.MemorySpace.SMEM)]
                 + x_specs + w_specs,
        out_specs=pl.BlockSpec(memory_space=pltpu.MemorySpace.SMEM),
        scratch_shapes=[pltpu.SMEM((1,), jnp.float32)],
        compiler_params=pltpu.CompilerParams(
            dimension_semantics=("arbitrary",)),
    )(mean_bias, *xs, *ws)

    return {"total_loss": out[0]}


def _reference(feats, weight, bias):
    feat = jnp.concatenate(feats, axis=1)[None]      # (1, B, 4)
    y = jnp.einsum("sbd,od->sbo", feat, weight,
                   precision=jax.lax.Precision.HIGHEST) + bias
    return jnp.mean(y.astype(jnp.float32))


if __name__ == "__main__":
    key = jax.random.PRNGKey(0)
    k_w, k_b, k_a, k_c, k_d = jax.random.split(key, 5)

    # Deterministic Linear(4, 2) params (torch-style uniform(-1/sqrt(4), 1/sqrt(4)))
    bound = 1.0 / jnp.sqrt(4.0)
    weight = jax.random.uniform(k_w, (2, 4), jnp.float32, -bound, bound)
    bias = jax.random.uniform(k_b, (2,), jnp.float32, -bound, bound)

    cases = []

    # Case 1: original test-sized input (tiny B -> single block, grid=1).
    b1 = 8
    k0, k1 = jax.random.split(k_a)
    cases.append(("tiny", [jax.random.normal(k0, (b1, 2), jnp.float32),
                           jax.random.normal(k1, (b1, 2), jnp.float32)]))

    # Case 2: large B -> lane-dense (rows,128) layout, gridded (grid=2) reduction.
    b2 = 1 << 17
    k0, k1 = jax.random.split(k_c)
    cases.append(("lane_dense", [jax.random.normal(k0, (b2, 2), jnp.float32),
                                 jax.random.normal(k1, (b2, 2), jnp.float32)]))

    # Case 3: widths that break lane-density -> row-blocked fallback, grid=3.
    b3 = 6000
    k0, k1 = jax.random.split(k_d)
    cases.append(("fallback", [jax.random.normal(k0, (b3, 3), jnp.float32),
                               jax.random.normal(k1, (b3, 1), jnp.float32)]))

    for name, feats in cases:
        got = jax.block_until_ready(
            fake_model_forward(feats, weight, bias)["total_loss"])
        ref = jax.block_until_ready(_reference(feats, weight, bias))
        assert jnp.allclose(got, ref, atol=1e-5, rtol=1e-4), (name, got, ref)

    print("KERNEL_OK")
</pallas_src>

<mosaic_0001>
module attributes {stable_mosaic.version = 11 : i64} {
  func.func @kernel(%arg0: i32, %arg1: memref<1xf32, #tpu.memory_space<smem>>, %arg2: memref<8x2xf32, #tpu.memory_space<vmem>>, %arg3: memref<8x2xf32, #tpu.memory_space<vmem>>, %arg4: memref<1x2xf32, #tpu.memory_space<vmem>>, %arg5: memref<1x2xf32, #tpu.memory_space<vmem>>, %arg6: memref<1xf32, #tpu.memory_space<smem>>, %arg7: memref<1xf32, #tpu.memory_space<smem>>) attributes {dimension_semantics = [#tpu.dimension_semantics<arbitrary>], iteration_bounds = array<i64: 1>, scalar_prefetch = 0 : i64, scratch_operands = 1 : i64, tpu.core_type = #tpu.core_type<tc>, window_params = [{transform_indices = @transform_0, window_bounds = array<i64: 1>}, {transform_indices = @transform_1, window_bounds = array<i64: 8, 2>}, {transform_indices = @transform_2, window_bounds = array<i64: 8, 2>}, {pipeline_mode = #tpu.pipeline_mode<synchronous>, transform_indices = @transform_3, window_bounds = array<i64: 1, 2>}, {pipeline_mode = #tpu.pipeline_mode<synchronous>, transform_indices = @transform_4, window_bounds = array<i64: 1, 2>}, {transform_indices = @transform_5, window_bounds = array<i64: 1>}]} {
    %c0_i32 = arith.constant 0 : i32
    %0 = arith.cmpi eq, %arg0, %c0_i32 : i32
    %1 = arith.extui %0 : i1 to i32
    %c0_i32_0 = arith.constant 0 : i32
    %2 = arith.cmpi ne, %1, %c0_i32_0 : i32
    scf.if %2 {
      %cst_14 = arith.constant 0.000000e+00 : f32
      %c0_15 = arith.constant 0 : index
      %27 = memref.load %arg7[%c0_15] : memref<1xf32, #tpu.memory_space<smem>>
      memref.store %cst_14, %arg7[%c0_15] : memref<1xf32, #tpu.memory_space<smem>>
    } else {
    }
    %c0 = arith.constant 0 : index
    %c0_1 = arith.constant 0 : index
    %3 = vector.load %arg2[%c0, %c0_1] : memref<8x2xf32, #tpu.memory_space<vmem>>, vector<8x2xf32>
    %c0_2 = arith.constant 0 : index
    %c0_3 = arith.constant 0 : index
    %4 = vector.load %arg4[%c0_2, %c0_3] : memref<1x2xf32, #tpu.memory_space<vmem>>, vector<1x2xf32>
    %5 = vector.broadcast %4 : vector<1x2xf32> to vector<8x2xf32>
    %6 = arith.mulf %3, %5 : vector<8x2xf32>
    %7 = vector.shape_cast %6 : vector<8x2xf32> to vector<1x8x2xf32>
    %cst = arith.constant dense<0.000000e+00> : vector<1xf32>
    %8 = vector.multi_reduction <add>, %7, %cst [1, 2] : vector<1x8x2xf32> to vector<1xf32>
    %9 = vector.shape_cast %8 : vector<1xf32> to vector<1x1x1xf32>
    %10 = vector.extract %9[0, 0, 0] : f32 from vector<1x1x1xf32>
    %cst_4 = arith.constant 0.000000e+00 : f32
    %11 = arith.addf %cst_4, %10 : f32
    %c0_5 = arith.constant 0 : index
    %c0_6 = arith.constant 0 : index
    %12 = vector.load %arg3[%c0_5, %c0_6] : memref<8x2xf32, #tpu.memory_space<vmem>>, vector<8x2xf32>
    %c0_7 = arith.constant 0 : index
    %c0_8 = arith.constant 0 : index
    %13 = vector.load %arg5[%c0_7, %c0_8] : memref<1x2xf32, #tpu.memory_space<vmem>>, vector<1x2xf32>
    %14 = vector.broadcast %13 : vector<1x2xf32> to vector<8x2xf32>
    %15 = arith.mulf %12, %14 : vector<8x2xf32>
    %16 = vector.shape_cast %15 : vector<8x2xf32> to vector<1x8x2xf32>
    %cst_9 = arith.constant dense<0.000000e+00> : vector<1xf32>
    %17 = vector.multi_reduction <add>, %16, %cst_9 [1, 2] : vector<1x8x2xf32> to vector<1xf32>
    %18 = vector.shape_cast %17 : vector<1xf32> to vector<1x1x1xf32>
    %19 = vector.extract %18[0, 0, 0] : f32 from vector<1x1x1xf32>
    %20 = arith.addf %11, %19 : f32
    %c0_10 = arith.constant 0 : index
    %21 = memref.load %arg7[%c0_10] : memref<1xf32, #tpu.memory_space<smem>>
    %22 = arith.addf %21, %20 : f32
    %c0_11 = arith.constant 0 : index
    %23 = memref.load %arg7[%c0_11] : memref<1xf32, #tpu.memory_space<smem>>
    memref.store %22, %arg7[%c0_11] : memref<1xf32, #tpu.memory_space<smem>>
    %c0_i32_12 = arith.constant 0 : i32
    %24 = arith.cmpi eq, %arg0, %c0_i32_12 : i32
    %25 = arith.extui %24 : i1 to i32
    %c0_i32_13 = arith.constant 0 : i32
    %26 = arith.cmpi ne, %25, %c0_i32_13 : i32
    scf.if %26 {
      %c0_14 = arith.constant 0 : index
      %27 = memref.load %arg7[%c0_14] : memref<1xf32, #tpu.memory_space<smem>>
      %cst_15 = arith.constant 6.250000e-02 : f32
      %28 = arith.mulf %27, %cst_15 : f32
      %c0_16 = arith.constant 0 : index
      %29 = memref.load %arg1[%c0_16] : memref<1xf32, #tpu.memory_space<smem>>
      %30 = arith.addf %28, %29 : f32
      %c0_17 = arith.constant 0 : index
      %31 = memref.load %arg6[%c0_17] : memref<1xf32, #tpu.memory_space<smem>>
      memref.store %30, %arg6[%c0_17] : memref<1xf32, #tpu.memory_space<smem>>
    } else {
    }
    return
  }
  func.func @transform_0(%arg0: i32) -> i32 {
    %c0_i32 = arith.constant 0 : i32
    %c0_i32_0 = arith.constant 0 : i32
    return %c0_i32 : i32
  }
  func.func @transform_1(%arg0: i32) -> (i32, i32) {
    %c0_i32 = arith.constant 0 : i32
    %c0_i32_0 = arith.constant 0 : i32
    return %arg0, %c0_i32 : i32, i32
  }
  func.func @transform_2(%arg0: i32) -> (i32, i32) {
    %c0_i32 = arith.constant 0 : i32
    %c0_i32_0 = arith.constant 0 : i32
    return %arg0, %c0_i32 : i32, i32
  }
  func.func @transform_3(%arg0: i32) -> (i32, i32) {
    %c0_i32 = arith.constant 0 : i32
    %c0_i32_0 = arith.constant 0 : i32
    %c0_i32_1 = arith.constant 0 : i32
    return %c0_i32, %c0_i32_0 : i32, i32
  }
  func.func @transform_4(%arg0: i32) -> (i32, i32) {
    %c0_i32 = arith.constant 0 : i32
    %c0_i32_0 = arith.constant 0 : i32
    %c0_i32_1 = arith.constant 0 : i32
    return %c0_i32, %c0_i32_0 : i32, i32
  }
  func.func @transform_5(%arg0: i32) -> i32 {
    %c0_i32 = arith.constant 0 : i32
    %c0_i32_0 = arith.constant 0 : i32
    return %c0_i32 : i32
  }
}

</mosaic_0001>

<llo_original>
// kernel: tpu_custom_call.1
$region0: #{tpu_custom_call.1}
  #allocation0 [shape = 'u32[]', space=smem, size = 0x4, offset = 0x4, fixed_abs, tag = 'smem constant byte address 0x4 - core index']
  #allocation1 [shape = 'u32[144,128]{1,0:T(1,128)}', space=vmem, size = 0x12000, scoped, tag = 'internal scratch']
  #allocation2 [shape = 'f32[1]{0:T(128)}', space=smem, size = 0x200, scoped, tag = 'scratch operand']
  #allocation3 [shape = 'f32[1]{0:T(128)S(6)}', space=smem, size = 0x200, scoped, tag = 'scoped memory for tpu_custom_call.1']
  %s0 = inlined_call_operand.<no memory space> [shape: f32[1], index: 0, kind: input, shape index: {}]
  %s1 = inlined_call_operand.vmem [shape: f32[8,2], index: 1, kind: input, shape index: {}]
  %s2 = inlined_call_operand.vmem [shape: f32[8,2], index: 2, kind: input, shape index: {}]
  %s3 = inlined_call_operand.vmem [shape: f32[1,2], index: 3, kind: input, shape index: {}]
  %s4 = inlined_call_operand.vmem [shape: f32[1,2], index: 4, kind: input, shape index: {}]
  %s5 = inlined_call_operand.hbm [shape: f32[1], index: 5, kind: output, shape index: {}]
  %s6 = sld [smem:[#allocation0]]
  $region38: #{tpu_custom_call.1} parent=0
    _
  %s8 = ssub.s32 1, %s6
  %s9 = scalar_select 0, %s8, %s6
  %10 = sst [smem:[#allocation3]] %s0
  $region1: #{tpu_custom_call.1} parent=0
    #allocation4 [shape = 'u8[512]{0}', space=smem, size = 0x200, scoped, tag = 'output window, operand 0, single buffered']
    #allocation5 [shape = 's32[1]{0}', space=sflag, size = 0x4, scoped, tag = 'scoped memory for tpu_custom_call.1']
    %11 = vsyncpa [#allocation5], 0
    // Predicated region
    $region2: #{tpu_custom_call.1} parent=1 // pred_check
      _
    $region3: #{tpu_custom_call.1} parent=1 // pred_check_branch
      %13 = sbr.rel (0) target = $region5
    $region4: #{tpu_custom_call.1} parent=1 // pred_region
      _
    $region5: #{tpu_custom_call.1} parent=1 // pred_fallthru
      _
    // Predicated region
    $region6: #{tpu_custom_call.1} parent=1 // pred_check
      _
    $region7: #{tpu_custom_call.1} parent=1 // pred_check_branch
      %15 = sbr.rel (0) target = $region9
    $region8: #{tpu_custom_call.1} parent=1 // pred_region
      _
    $region9: #{tpu_custom_call.1} parent=1 // pred_fallthru
      _
    // Predicated region
    $region10: #{tpu_custom_call.1} parent=1 // pred_check
      _
    $region11: #{tpu_custom_call.1} parent=1 // pred_check_branch
      %17 = sbr.rel (0) target = $region13
    $region12: #{tpu_custom_call.1} parent=1 // pred_region
      _
    $region13: #{tpu_custom_call.1} parent=1 // pred_fallthru
      _
    // Predicated region
    $region14: #{tpu_custom_call.1} parent=1 // pred_check
      _
    $region15: #{tpu_custom_call.1} parent=1 // pred_check_branch
      %19 = sbr.rel (0) target = $region17
    $region16: #{tpu_custom_call.1} parent=1 // pred_region
      _
    $region17: #{tpu_custom_call.1} parent=1 // pred_fallthru
      _
    // Predicated region
    $region18: #{tpu_custom_call.1} parent=1 // pred_check
      _
    $region19: #{tpu_custom_call.1} parent=1 // pred_check_branch
      %21 = sbr.rel (0) target = $region21
    $region20: #{tpu_custom_call.1} parent=1 // pred_region
      _
    $region21: #{tpu_custom_call.1} parent=1 // pred_fallthru
      _
    %p22 = scmp.eq.s32.totalorder 0, 0
    // Predicated region
    $region22: #{tpu_custom_call.1} parent=1 // pred_check
      %p23 = pneg %p22
    $region23: #{tpu_custom_call.1} parent=1 // pred_check_branch
      %25 = sbr.rel (%p23) target = $region25
    $region24: #{tpu_custom_call.1} parent=1 // pred_region
      %s26 = scalar_lea.smem [#allocation2], 0
      %27 = sst [smem:[%s26]] 0.0
    $region25: #{tpu_custom_call.1} parent=1 // pred_fallthru
      _
    %v28 = vld [vmem:[%s1] sm:$0xff]
    %v29 = vld [vmem:[%s3] sm:$0x1]
    %v31 = vlaneseq
    %v32 = vshrl.u32 %v31, 7
    %v33 = vsub.s32 0, %v32
    %v34 = vrot.slane %v29, %v33
    %v36 = vmul.f32 %v28, %v34
    %vm37 = vcmask 15360
    %v38 = vsel %vm37, %v36, 0.0
    %39 = vadd.xlane.f32.xlu0 %v38
    %v40 = vpop.xlane.xlu0 %39
    %v41 = vrot.slane %v40, 4
    %v42 = vadd.f32 %v40, %v41
    %v43 = vrot.slane %v42, 2
    %v44 = vadd.f32 %v42, %v43
    %v45 = vrot.slane %v44, 1
    %v46 = vadd.f32 %v44, %v45
    %s47 = vtos %v46
    %s48 = sadd.f32 %s47, 0.0
    %v49 = vld [vmem:[%s2] sm:$0xff]
    %v50 = vld [vmem:[%s4] sm:$0x1]
    %v52 = vlaneseq
    %v53 = vshrl.u32 %v52, 7
    %v54 = vsub.s32 0, %v53
    %v55 = vrot.slane %v50, %v54
    %v57 = vmul.f32 %v49, %v55
    %v58 = vsel %vm37, %v57, 0.0
    %59 = vadd.xlane.f32.xlu0 %v58
    %v60 = vpop.xlane.xlu0 %59
    %v61 = vrot.slane %v60, 4
    %v62 = vadd.f32 %v60, %v61
    %v63 = vrot.slane %v62, 2
    %v64 = vadd.f32 %v62, %v63
    %v65 = vrot.slane %v64, 1
    %v66 = vadd.f32 %v64, %v65
    %s67 = vtos %v66
    %s68 = sadd.f32 %s48, %s67
    %s69 = sld [smem:[#allocation2]]
    %s70 = sadd.f32 %s69, %s68
    %s71 = scalar_lea.smem [#allocation2], 0
    %72 = sst [smem:[%s71]] %s70
    // Predicated region
    $region26: #{tpu_custom_call.1} parent=1 // pred_check
      %p73 = pneg %p22
    $region27: #{tpu_custom_call.1} parent=1 // pred_check_branch
      %75 = sbr.rel (%p73) target = $region29
    $region28: #{tpu_custom_call.1} parent=1 // pred_region
      %s76 = sld [smem:[#allocation2]]
      %s77 = smul.f32 %s76, 0.0625
      %s78 = sld [smem:[#allocation3]]
      %s79 = sadd.f32 %s77, %s78
      %s80 = scalar_lea.smem [#allocation4], 0
      %81 = sst [smem:[%s80]] %s79
    $region29: #{tpu_custom_call.1} parent=1 // pred_fallthru
      _
    // Predicated region
    $region30: #{tpu_custom_call.1} parent=1 // pred_check
      _
    $region31: #{tpu_custom_call.1} parent=1 // pred_check_branch
      %83 = sbr.rel (0) target = $region33
    $region32: #{tpu_custom_call.1} parent=1 // pred_region
      %s85 = ssub.s32 16, 16
      %86 = vsyncadd [#allocation5], %s85
      %89 = dma.smem_to_hbm [#allocation4], 16, %s5, [#allocation5]
    $region33: #{tpu_custom_call.1} parent=1 // pred_fallthru
      _
    // Predicated region
    $region34: #{tpu_custom_call.1} parent=1 // pred_check
      _
    $region35: #{tpu_custom_call.1} parent=1 // pred_check_branch
      %91 = sbr.rel (0) target = $region37
    $region36: #{tpu_custom_call.1} parent=1 // pred_region
      %92 = dma.done [#allocation5], 16
    $region37: #{tpu_custom_call.1} parent=1 // pred_fallthru
      _
    %93 = sfence
    %94 = vsyncpa [#allocation5], 1

</llo_original>
